<compile_context>
chip_gen: v7x
topology: tpu7x:2x2x1
jax: 0.10.0
libtpu: 0.0.40
codegen_flags: <defaults>
</compile_context>

<pallas_src>
import jax
import jax.numpy as jnp
from jax import lax
from jax.experimental import pallas as pl
from jax.experimental.pallas import tpu as pltpu


def _abs_pos_emb_kernel(ids_ref, mask_ref, pos_ref, tok_hbm, o_ref, tok_buf, sem):
    """One grid step = TQ consecutive tokens of the flattened (B*S,) stream."""
    tq = o_ref.shape[0]
    t = pl.program_id(0)
    base = t * tq

    # ---- Gather TQ token-embedding rows HBM -> VMEM -----------------------
    # Issue every row DMA before waiting on any of them so the DMA engine
    # processes them concurrently.
    def _issue(r, carry):
        row = ids_ref[base + r]
        pltpu.make_async_copy(
            tok_hbm.at[pl.ds(row, 1), :],
            tok_buf.at[pl.ds(r, 1), :],
            sem,
        ).start()
        return carry

    lax.fori_loop(0, tq, _issue, 0)

    def _wait(r, carry):
        pltpu.make_async_copy(
            tok_hbm.at[pl.ds(0, 1), :],
            tok_buf.at[pl.ds(r, 1), :],
            sem,
        ).wait()
        return carry

    lax.fori_loop(0, tq, _wait, 0)

    # ---- token_emb + pos_emb * pad_mask  (pure VPU, lane-dense store) -----
    o_ref[...] = tok_buf[...] + pos_ref[...] * mask_ref[...]
    # TODO(synk): dropout is eval-mode identity here; training-mode dropout
    # would use pltpu.prng_seed / pltpu.prng_random_bits on this output tile.


def _pick_tile_rows(seq_len: int, max_rows: int = 512) -> int:
    """Largest multiple of 8 that divides seq_len, capped at max_rows."""
    best = 8
    for cand in range(8, min(seq_len, max_rows) + 1, 8):
        if seq_len % cand == 0:
            best = cand
    return best


def abs_pos_embedding(x, token_table, pos_table):
    """AbsPosEmbedding forward (eval mode).

    x:           (B, S) int token ids, 0 == padding.
    token_table: (V, D)   token embedding table (row 0 = pad row).
    pos_table:   (L+1, D) position embedding table (row 0 = pad row).
    Returns (B, S, D) in the table dtype.
    """
    B, S = x.shape
    V, D = token_table.shape
    L = pos_table.shape[0] - 1
    assert S <= L, "sequence longer than max_len"
    assert S % 8 == 0, "sequence length must be a multiple of 8"  # TODO(synk): pad ragged S
    dt = token_table.dtype
    n = B * S

    tq = _pick_tile_rows(S)          # rows per grid step (multiple of 8, divides S)
    n_tiles = n // tq
    s_tiles = S // tq

    ids_raw = x.reshape(n).astype(jnp.int32)
    # Clamp so an out-of-range id can never drive the row DMA out of bounds.
    ids = jnp.clip(ids_raw, 0, V - 1)
    # Pad mask as a (n, 1) column so it broadcasts over D inside the kernel.
    mask = (ids_raw > 0).astype(dt).reshape(n, 1)
    # Positions 1..S as one contiguous slab -> plain (tq, D) BlockSpec DMA,
    # no per-token position gather.  Row 0 of pos_table (pad row) is all
    # zeros (nn.Embedding padding_idx=0), so masking with 0 is exact.
    pos_slab = lax.slice_in_dim(pos_table, 1, S + 1, axis=0)  # (S, D)

    out_flat = pl.pallas_call(
        _abs_pos_emb_kernel,
        out_shape=jax.ShapeDtypeStruct((n, D), dt),
        grid_spec=pltpu.PrefetchScalarGridSpec(
            # ids land in SMEM before the grid runs; the kernel reads them as
            # scalars to address the per-row token DMAs.
            # TODO(synk): for very long B*S, feed per-tile id slices instead
            # (whole-array prefetch pads SMEM to next_pow2(4*B*S) bytes).
            num_scalar_prefetch=1,
            grid=(n_tiles,),
            in_specs=[
                pl.BlockSpec((tq, 1), lambda t, ids: (t, 0)),            # pad mask
                pl.BlockSpec((tq, D), lambda t, ids: (t % s_tiles, 0)),  # position slab
                pl.BlockSpec(memory_space=pl.ANY),                       # token table (HBM)
            ],
            out_specs=pl.BlockSpec((tq, D), lambda t, ids: (t, 0)),
            scratch_shapes=[
                pltpu.VMEM((tq, D), dt),      # gathered token rows for this tile
                pltpu.SemaphoreType.DMA,      # row-DMA completion semaphore
            ],
        ),
        compiler_params=pltpu.CompilerParams(
            # Carry-free body -> safe to shard tiles across v7x's two TCs.
            dimension_semantics=("parallel",),
        ),
        cost_estimate=pl.CostEstimate(
            flops=2 * n * D,
            transcendentals=0,
            bytes_accessed=(2 * n * D + S * D) * dt.itemsize + n * 8,
        ),
    )(ids, mask, pos_slab, token_table)

    return out_flat.reshape(B, S, D)


if __name__ == "__main__":
    # Small config consistent with the module's forward semantics.
    token_size = 50
    max_len = 16
    d_model = 32
    B, S = 2, 8

    key = jax.random.PRNGKey(0)
    k_tok, k_pos, k_x = jax.random.split(key, 3)

    # Deterministic parameter init; row 0 zeroed (nn.Embedding padding_idx=0).
    token_table = jax.random.normal(k_tok, (token_size, d_model), jnp.float32)
    token_table = token_table.at[0].set(0.0)
    pos_table = jax.random.normal(k_pos, (max_len + 1, d_model), jnp.float32)
    pos_table = pos_table.at[0].set(0.0)

    # Example input token ids, with some padding zeros.
    x = jax.random.randint(k_x, (B, S), 0, token_size, dtype=jnp.int32)
    x = x.at[0, -2:].set(0)
    x = x.at[1, -3:].set(0)

    out = abs_pos_embedding(x, token_table, pos_table)
    out = jax.block_until_ready(out)

    # Pure-JAX reference check.
    mask = (x > 0).astype(jnp.int32)
    position = jnp.arange(1, S + 1, dtype=jnp.int32)[None, :] * mask
    ref = jnp.take(token_table, x, axis=0) + jnp.take(pos_table, position, axis=0)
    assert out.shape == (B, S, d_model)
    assert jnp.allclose(out, ref, atol=1e-5), "mismatch vs reference"

    print("KERNEL_OK")
</pallas_src>

<mosaic_0001>
module attributes {stable_mosaic.version = 11 : i64} {
  func.func @_abs_pos_emb_kernel(%arg0: i32, %arg1: memref<16xi32, #tpu.memory_space<smem>>, %arg2: memref<8x1xf32, #tpu.memory_space<vmem>>, %arg3: memref<8x32xf32, #tpu.memory_space<vmem>>, %arg4: memref<50x32xf32, #tpu.memory_space<any>>, %arg5: memref<8x32xf32, #tpu.memory_space<vmem>>, %arg6: memref<8x32xf32, #tpu.memory_space<vmem>>, %arg7: memref<!tpu.dma_semaphore, #tpu.memory_space<semaphore_mem>>) attributes {dimension_semantics = [#tpu.dimension_semantics<parallel>], iteration_bounds = array<i64: 2>, scalar_prefetch = 1 : i64, scratch_operands = 2 : i64, tpu.core_type = #tpu.core_type<tc>, window_params = [{transform_indices = @transform_0, window_bounds = array<i64: 8, 1>}, {transform_indices = @transform_1, window_bounds = array<i64: 8, 32>}, {}, {transform_indices = @transform_3, window_bounds = array<i64: 8, 32>}]} {
    %c8_i32 = arith.constant 8 : i32
    %0 = arith.muli %arg0, %c8_i32 : i32
    %c0_i32 = arith.constant 0 : i32
    %c8_i32_0 = arith.constant 8 : i32
    %1 = arith.addi %c0_i32, %c8_i32_0 : i32
    %c1_i32 = arith.constant 1 : i32
    scf.for %arg8 = %c0_i32 to %1 step %c1_i32  : i32 {
      %10 = arith.addi %0, %arg8 : i32
      %11 = arith.index_cast %10 : i32 to index
      %12 = memref.load %arg1[%11] : memref<16xi32, #tpu.memory_space<smem>>
      %c0_i32_13 = arith.constant 0 : i32
      %13 = tpu.memref_slice %arg4[%12, %c0_i32_13] : memref<50x32xf32, #tpu.memory_space<any>> -> memref<1x32xf32, #tpu.memory_space<any>>
      %c0_i32_14 = arith.constant 0 : i32
      %14 = tpu.memref_slice %arg6[%arg8, %c0_i32_14] : memref<8x32xf32, #tpu.memory_space<vmem>> -> memref<1x32xf32, #tpu.memory_space<vmem>>
      tpu.enqueue_dma source(%13 : memref<1x32xf32, #tpu.memory_space<any>>) target(%14 : memref<1x32xf32, #tpu.memory_space<vmem>>) target_semaphore(%arg7 : memref<!tpu.dma_semaphore, #tpu.memory_space<semaphore_mem>>)
    }
    %c8_i32_1 = arith.constant 8 : i32
    %c0_i32_2 = arith.constant 0 : i32
    %c8_i32_3 = arith.constant 8 : i32
    %2 = arith.addi %c0_i32_2, %c8_i32_3 : i32
    %c1_i32_4 = arith.constant 1 : i32
    scf.for %arg8 = %c0_i32_2 to %2 step %c1_i32_4  : i32 {
      %c0_i32_13 = arith.constant 0 : i32
      %c0_i32_14 = arith.constant 0 : i32
      %10 = tpu.memref_slice %arg4[%c0_i32_13, %c0_i32_14] : memref<50x32xf32, #tpu.memory_space<any>> -> memref<1x32xf32, #tpu.memory_space<any>>
      %c0_i32_15 = arith.constant 0 : i32
      %11 = tpu.memref_slice %arg6[%arg8, %c0_i32_15] : memref<8x32xf32, #tpu.memory_space<vmem>> -> memref<1x32xf32, #tpu.memory_space<vmem>>
      tpu.wait_dma2 semaphore(%arg7 : memref<!tpu.dma_semaphore, #tpu.memory_space<semaphore_mem>>) src(%10 : memref<1x32xf32, #tpu.memory_space<any>>) dst(%11 : memref<1x32xf32, #tpu.memory_space<vmem>>)
    }
    %c8_i32_5 = arith.constant 8 : i32
    %c0 = arith.constant 0 : index
    %c0_6 = arith.constant 0 : index
    %3 = vector.load %arg6[%c0, %c0_6] : memref<8x32xf32, #tpu.memory_space<vmem>>, vector<8x32xf32>
    %c0_7 = arith.constant 0 : index
    %c0_8 = arith.constant 0 : index
    %4 = vector.load %arg3[%c0_7, %c0_8] : memref<8x32xf32, #tpu.memory_space<vmem>>, vector<8x32xf32>
    %c0_9 = arith.constant 0 : index
    %c0_10 = arith.constant 0 : index
    %5 = vector.load %arg2[%c0_9, %c0_10] : memref<8x1xf32, #tpu.memory_space<vmem>>, vector<8x1xf32>
    %6 = vector.broadcast %5 : vector<8x1xf32> to vector<8x32xf32>
    %7 = arith.mulf %4, %6 : vector<8x32xf32>
    %8 = arith.addf %3, %7 : vector<8x32xf32>
    %c0_11 = arith.constant 0 : index
    %c0_12 = arith.constant 0 : index
    %9 = vector.load %arg5[%c0_11, %c0_12] : memref<8x32xf32, #tpu.memory_space<vmem>>, vector<8x32xf32>
    tpu.vector_store %arg5[%c0_11, %c0_12], %8 {strides = array<i32>} : memref<8x32xf32, #tpu.memory_space<vmem>>, vector<8x32xf32>,
    return
  }
  func.func @transform_0(%arg0: i32, %arg1: memref<16xi32, #tpu.memory_space<smem>>) -> (i32, i32) {
    %c0_i32 = arith.constant 0 : i32
    %c0_i32_0 = arith.constant 0 : i32
    return %arg0, %c0_i32 : i32, i32
  }
  func.func @transform_1(%arg0: i32, %arg1: memref<16xi32, #tpu.memory_space<smem>>) -> (i32, i32) {
    %c1_i32 = arith.constant 1 : i32
    %c0_i32 = arith.constant 0 : i32
    %0 = arith.cmpi eq, %c1_i32, %c0_i32 : i32
    %c1_i32_0 = arith.constant 1 : i32
    %1 = arith.select %0, %c1_i32_0, %c1_i32 : i32
    %2 = arith.remsi %arg0, %1 : i32
    %c0_i32_1 = arith.constant 0 : i32
    %3 = arith.cmpi ne, %2, %c0_i32_1 : i32
    %c0_i32_2 = arith.constant 0 : i32
    %4 = arith.cmpi slt, %2, %c0_i32_2 : i32
    %c0_i32_3 = arith.constant 0 : i32
    %5 = arith.cmpi slt, %1, %c0_i32_3 : i32
    %6 = arith.xori %4, %5 : i1
    %7 = arith.andi %6, %3 : i1
    %8 = arith.addi %2, %1 : i32
    %9 = arith.select %7, %8, %2 : i32
    %c0_i32_4 = arith.constant 0 : i32
    %c0_i32_5 = arith.constant 0 : i32
    return %9, %c0_i32_4 : i32, i32
  }
  func.func @transform_3(%arg0: i32, %arg1: memref<16xi32, #tpu.memory_space<smem>>) -> (i32, i32) {
    %c0_i32 = arith.constant 0 : i32
    %c0_i32_0 = arith.constant 0 : i32
    return %arg0, %c0_i32 : i32, i32
  }
}

</mosaic_0001>

<llo_original>
// kernel: tpu_custom_call.1
$region0: #{tpu_custom_call.1}
  #allocation0 [shape = 'u32[]', space=smem, size = 0x4, offset = 0x4, fixed_abs, tag = 'smem constant byte address 0x4 - core index']
  #allocation1 [shape = 'u32[144,128]{1,0:T(1,128)}', space=vmem, size = 0x12000, scoped, tag = 'internal scratch']
  #allocation2 [shape = 'f32[8,32]{1,0:T(8,128)}', space=vmem, size = 0x1000, scoped, tag = 'scratch operand']
  #allocation3 [shape = 's32[1]{0}', space=sflag, size = 0x4, scoped, tag = 'scratch operand']
  #allocation4 [shape = 's32[1]{0}', space=sflag, size = 0x4, scoped, tag = 'scoped memory for tpu_custom_call.1']
  #allocation5 [shape = 'u8[512]{0}', space=smem, size = 0x200, scoped, tag = 'prefetched SMEM operand 0']
  #allocation8 [shape = 's32[]', space=sflag, size = 0x4, offset = 0, fixed_abs, tag = 'sflag constant byte address 0x0 - dummy sync flag']
  %s0 = inlined_call_operand.vmem [shape: s32[16], index: 0, kind: input, shape index: {}]
  %s1 = inlined_call_operand.vmem [shape: f32[16,1], index: 1, kind: input, shape index: {}]
  %s2 = inlined_call_operand.vmem [shape: f32[8,32], index: 2, kind: input, shape index: {}]
  %s3 = inlined_call_operand.vmem [shape: f32[50,32], index: 3, kind: input, shape index: {}]
  %s4 = inlined_call_operand.hbm [shape: f32[16,32], index: 4, kind: output, shape index: {}]
  %s5 = sld [smem:[#allocation0]]
  $region85: #{tpu_custom_call.1} parent=0
    _
  %s7 = ssub.s32 1, %s5
  %s8 = scalar_select 0, %s7, %s5
  %s9 = sshll.u32 %s0, 4
  %s10 = int_to_ptr.vmem [resolvable:$true] %s9
  %12 = dma.vmem_to_smem %s10, 16, [#allocation5], [#allocation4]
  %13 = dma.done [#allocation4], 16
  %14 = sfence
  $region1: #{tpu_custom_call.1} parent=0
    #allocation6 [shape = 'u8[8192]{0}', space=vmem, size = 0x2000, scoped, tag = 'output window, operand 0']
    #allocation7 [shape = 's32[2]{0}', space=sflag, size = 0x8, scoped, tag = 'scoped memory for tpu_custom_call.1']
    %15 = vsyncpa [#allocation7], 0
    %s16 = scalar_lea.sflag [#allocation7], 1
    %17 = vsyncpa %s16, 0
    loop: start=0, step=1, limit=4
    $region2: #{tpu_custom_call.1} parent=1 // loop_pre_header
      _
    $region3: #{tpu_custom_call.1} parent=1 // loop_header
      %s19 = sphi 0, %s23
      %p20 = scmp.ge.s32.totalorder %s19, 4
      %s29 = sphi 0, %s31
      %s32 = sphi 0, %s29
      %s33 = sphi 0, %s32
      %s49 = sphi 0, %s33
      %s53 = sphi 0, %s53
      %s55 = sphi 0, %s53
      %s56 = sphi 0, %s55
      %s70 = sphi 0, %s56
      %s76 = sphi 0, %s78
      %s79 = sphi 0, %s76
      %s80 = sphi 0, %s79
      %s96 = sphi 0, %s80
    $region4: #{tpu_custom_call.1} parent=1 // loop_header_branch
      %22 = sbr.rel (%p20) target = $region8
    $region5: #{tpu_custom_call.1} parent=1 // loop_body
      %s24 = ssub.s32 %s19, 1
      %s25 = ssub.s32 %s19, 2
      %s26 = sadd.s32 %s19, 1
      %s27 = ssub.s32 %s19, %s26
      %p28 = scmp.eq.s32.totalorder %s27, 0
      %s30 = sadd.s32 %s29, 1
      %s31 = scalar_select %p28, %s29, %s30
      %p34 = pneg %p28
      %p35 = scmp.eq.s32.totalorder %s19, 1
      %p36 = por %p34, %p35
      %p37 = scmp.ne.s32.totalorder %s29, %s32
      %p38 = scmp.eq.s32.totalorder %s19, 0
      %p39 = por %p37, %p38
      %p40 = scmp.ne.s32.totalorder %s29, %s32
      %p41 = scmp.eq.s32.totalorder %s24, 1
      %p42 = por %p40, %p41
      %p43 = scmp.ne.s32.totalorder %s32, %s33
      %p44 = scmp.eq.s32.totalorder %s24, 0
      %p45 = por %p43, %p44
      %p46 = scmp.ne.s32.totalorder %s32, %s33
      %p47 = scmp.eq.s32.totalorder %s25, 1
      %p48 = por %p46, %p47
      %p50 = scmp.ne.s32.totalorder %s33, %s49
      %p51 = scmp.eq.s32.totalorder %s25, 0
      %p52 = por %p50, %p51
      %s54 = sadd.s32 %s53, 1
      %p57 = scmp.eq.s32.totalorder %s19, 1
      %p58 = scmp.ne.s32.totalorder %s53, %s55
      %p59 = scmp.eq.s32.totalorder %s19, 0
      %p60 = por %p58, %p59
      %p61 = scmp.ne.s32.totalorder %s53, %s55
      %p62 = scmp.eq.s32.totalorder %s24, 1
      %p63 = por %p61, %p62
      %p64 = scmp.ne.s32.totalorder %s55, %s56
      %p65 = scmp.eq.s32.totalorder %s24, 0
      %p66 = por %p64, %p65
      %p67 = scmp.ne.s32.totalorder %s55, %s56
      %p68 = scmp.eq.s32.totalorder %s25, 1
      %p69 = por %p67, %p68
      %p71 = scmp.ne.s32.totalorder %s56, %s70
      %p72 = scmp.eq.s32.totalorder %s25, 0
      %p73 = por %p71, %p72
      %s74 = ssub.s32 %s19, %s26
      %p75 = scmp.eq.s32.totalorder %s74, 0
      %s77 = sadd.s32 %s76, 1
      %s78 = scalar_select %p75, %s76, %s77
      %p81 = pneg %p75
      %p82 = scmp.eq.s32.totalorder %s19, 1
      %p83 = por %p81, %p82
      %p84 = scmp.ne.s32.totalorder %s76, %s79
      %p85 = scmp.eq.s32.totalorder %s19, 0
      %p86 = por %p84, %p85
      %p87 = scmp.ne.s32.totalorder %s76, %s79
      %p88 = scmp.eq.s32.totalorder %s24, 1
      %p89 = por %p87, %p88
      %p90 = scmp.ne.s32.totalorder %s79, %s80
      %p91 = scmp.eq.s32.totalorder %s24, 0
      %p92 = por %p90, %p91
      %p93 = scmp.ne.s32.totalorder %s79, %s80
      %p94 = scmp.eq.s32.totalorder %s25, 1
      %p95 = por %p93, %p94
      %p97 = scmp.ne.s32.totalorder %s80, %s96
      %p98 = scmp.eq.s32.totalorder %s25, 0
      %p99 = por %p97, %p98
      %p100 = scmp.le.s32.totalorder 1, %s19
      %p101 = scmp.lt.s32.totalorder %s19, 3
      %p102 = pnand %p100, %p101
      %p103 = pneg %p102
      // Predicated region
      $region9: #{tpu_custom_call.1} parent=5 // pred_check
        _
      $region10: #{tpu_custom_call.1} parent=5 // pred_check_branch
        %105 = sbr.rel (%p102) target = $region12
      $region11: #{tpu_custom_call.1} parent=5 // pred_region
        %s106 = ssub.s32 %s19, 1
        // Predicated region
        $region13: #{tpu_custom_call.1} parent=11 // pred_check
          %p107 = pneg %p66
        $region14: #{tpu_custom_call.1} parent=11 // pred_check_branch
          %109 = sbr.rel (%p107) target = $region16
        $region15: #{tpu_custom_call.1} parent=11 // pred_region
          _
        $region16: #{tpu_custom_call.1} parent=11 // pred_fallthru
          _
      $region12: #{tpu_custom_call.1} parent=5 // pred_fallthru
        _
      %p110 = scmp.lt.s32.totalorder %s19, 2
      // Predicated region
      $region17: #{tpu_custom_call.1} parent=5 // pred_check
        %p111 = pneg %p110
      $region18: #{tpu_custom_call.1} parent=5 // pred_check_branch
        %113 = sbr.rel (%p111) target = $region20
      $region19: #{tpu_custom_call.1} parent=5 // pred_region
        // Predicated region
        $region21: #{tpu_custom_call.1} parent=19 // pred_check
          %p114 = pneg %p39
        $region22: #{tpu_custom_call.1} parent=19 // pred_check_branch
          %116 = sbr.rel (%p114) target = $region24
        $region23: #{tpu_custom_call.1} parent=19 // pred_region
          %p117 = scmp.lt.s32.totalorder %s19, 1
          %s118 = scalar_select %p117, %s19, 1
          %s119 = smul.addr %s118, 8
          %s120 = scalar_lea.vmem %s1, %s119
        $region24: #{tpu_custom_call.1} parent=19 // pred_fallthru
          _
      $region20: #{tpu_custom_call.1} parent=5 // pred_fallthru
        _
      %p121 = scmp.le.s32.totalorder 1, %s19
      %p122 = scmp.lt.s32.totalorder %s19, 3
      %p123 = pnand %p121, %p122
      %p124 = pneg %p123
      // Predicated region
      $region25: #{tpu_custom_call.1} parent=5 // pred_check
        _
      $region26: #{tpu_custom_call.1} parent=5 // pred_check_branch
        %126 = sbr.rel (%p123) target = $region28
      $region27: #{tpu_custom_call.1} parent=5 // pred_region
        %s127 = ssub.s32 %s19, 1
        %p128 = scmp.lt.s32.totalorder %s24, 1
        %s129 = scalar_select %p128, %s24, 1
        %s130 = smul.addr %s129, 8
        %s131 = scalar_lea.vmem %s1, %s130
        %p132 = pneg %p45
        %p133 = pneg %p42
        %p134 = pneg %p66
        %p135 = pneg %p63
        %p136 = pneg %p92
        %p137 = pneg %p89
        %s138 = sand.u32 %s79, 1
        %s139 = scalar_lea.sflag [#allocation7], %s138
        %s140 = sand.u32 %s79, 1
        %s141 = smul.addr %s140, 8
        %s142 = scalar_lea.vmem [#allocation6], %s141
        %p143 = scmp.lt.s32.totalorder %s24, 1
        %s144 = scalar_select %p143, %s24, 1
        %s145 = smul.addr %s144, 8
        %s146 = scalar_lea.vmem %s1, %s145
        %s147 = smul.u32 %s24, 8
        loop: start=0, step=1, limit=8
        $region29: #{tpu_custom_call.1} parent=27 // loop_pre_header
          _
        $region30: #{tpu_custom_call.1} parent=27 // loop_header
          %s149 = sphi 0, %s153
          %p150 = scmp.ge.s32.totalorder %s149, 8
        $region31: #{tpu_custom_call.1} parent=27 // loop_header_branch
          %152 = sbr.rel (%p150) target = $region35
        $region32: #{tpu_custom_call.1} parent=27 // loop_body
          %s154 = sadd.s32 %s147, %s149
          %s155 = sld [smem:[#allocation5 + %s154]]
          %s156 = scalar_lea.vmem %s3, %s155
          %s157 = scalar_lea.vmem [#allocation2], %s149
          %p159 = scmp.lt.u32.totalorder 1, 8
          %p160 = pneg %p159
          // Predicated region
          $region36: #{tpu_custom_call.1} parent=32 // pred_check
            _
          $region37: #{tpu_custom_call.1} parent=32 // pred_check_branch
            %162 = sbr.rel (%p159) target = $region39
          $region38: #{tpu_custom_call.1} parent=32 // pred_region
            %s177 = sand.u32 1, 7
            %p178 = scmp.eq.s32.totalorder %s177, 0
            %p179 = pneg %p178
            // Predicated region
            $region51: #{tpu_custom_call.1} parent=38 // pred_check
              _
            $region52: #{tpu_custom_call.1} parent=38 // pred_check_branch
              %181 = sbr.rel (%p178) target = $region54
            $region53: #{tpu_custom_call.1} parent=38 // pred_region
              %s182 = sand.u32 1, 7
              %s183 = ssub.s32 1, %s182
              %s184 = scalar_lea.vmem %s156, %s183
              %s185 = ssub.s32 1, %s182
              %s186 = scalar_lea.vmem %s157, %s185 [#allocation2]
              %s187 = sshllo.u32 0, %s182
              loop: start=0, step=1, limit=1
              $region55: #{tpu_custom_call.1} parent=53 // loop_pre_header
                _
              $region56: #{tpu_custom_call.1} parent=53 // loop_header
                %s189 = sphi 0, %s193
                %p190 = scmp.ge.s32.totalorder %s189, 1
                %s194 = sphi %s184, %s184
                %s195 = sphi %s186, %s186
              $region57: #{tpu_custom_call.1} parent=53 // loop_header_branch
                %192 = sbr.rel (%p190) target = $region61
              $region58: #{tpu_custom_call.1} parent=53 // loop_body
                %v196 = vld [vmem:[%s194] sm:%s187]
                %197 = vst [vmem:[%s195] sm:%s187] %v196
              $region59: #{tpu_custom_call.1} parent=53 // loop_footer
                %s193 = sadd.s32 1, %s189
              $region60: #{tpu_custom_call.1} parent=53 // loop_footer_branch
                %188 = sbr.rel target = $region56
              $region61: #{tpu_custom_call.1} parent=53 // loop_exit
                _
            $region54: #{tpu_custom_call.1} parent=38 // pred_fallthru
              _
          $region39: #{tpu_custom_call.1} parent=32 // pred_fallthru
            _
          // Predicated region
          $region40: #{tpu_custom_call.1} parent=32 // pred_check
            %p163 = pneg %p159
          $region41: #{tpu_custom_call.1} parent=32 // pred_check_branch
            %165 = sbr.rel (%p163) target = $region43
          $region42: #{tpu_custom_call.1} parent=32 // pred_region
            %s166 = sshllo.u32 0, 1
            loop: start=0, step=1, limit=1
            $region44: #{tpu_custom_call.1} parent=42 // loop_pre_header
              _
            $region45: #{tpu_custom_call.1} parent=42 // loop_header
              %s168 = sphi 0, %s172
              %p169 = scmp.ge.s32.totalorder %s168, 1
              %s173 = sphi %s156, %s156
              %s174 = sphi %s157, %s157
            $region46: #{tpu_custom_call.1} parent=42 // loop_header_branch
              %171 = sbr.rel (%p169) target = $region50
            $region47: #{tpu_custom_call.1} parent=42 // loop_body
              %v175 = vld [vmem:[%s173] sm:%s166]
              %176 = vst [vmem:[%s174] sm:%s166] %v175
            $region48: #{tpu_custom_call.1} parent=42 // loop_footer
              %s172 = sadd.s32 1, %s168
            $region49: #{tpu_custom_call.1} parent=42 // loop_footer_branch
              %167 = sbr.rel target = $region45
            $region50: #{tpu_custom_call.1} parent=42 // loop_exit
              _
          $region43: #{tpu_custom_call.1} parent=32 // pred_fallthru
            _
          // Predicated region
          $region62: #{tpu_custom_call.1} parent=32 // pred_check
            _
          $region63: #{tpu_custom_call.1} parent=32 // pred_check_branch
            %200 = sbr.rel (0) target = $region65
          $region64: #{tpu_custom_call.1} parent=32 // pred_region
            %201 = vsyncadd [#allocation3], 16
          $region65: #{tpu_custom_call.1} parent=32 // pred_fallthru
            _
        $region33: #{tpu_custom_call.1} parent=27 // loop_footer
          %s153 = sadd.s32 1, %s149
        $region34: #{tpu_custom_call.1} parent=27 // loop_footer_branch
          %148 = sbr.rel target = $region30
        $region35: #{tpu_custom_call.1} parent=27 // loop_exit
          _
        loop: start=0, step=1, limit=8
        $region66: #{tpu_custom_call.1} parent=27 // loop_pre_header
          _
        $region67: #{tpu_custom_call.1} parent=27 // loop_header
          %s203 = sphi 0, %s207
          %p204 = scmp.ge.s32.totalorder %s203, 8
        $region68: #{tpu_custom_call.1} parent=27 // loop_header_branch
          %206 = sbr.rel (%p204) target = $region72
        $region69: #{tpu_custom_call.1} parent=27 // loop_body
          %s208 = smul.u32 1, 1
          %s209 = sshll.u32 %s208, 4
          %210 = dma.done [#allocation3], %s209
        $region70: #{tpu_custom_call.1} parent=27 // loop_footer
          %s207 = sadd.s32 1, %s203
        $region71: #{tpu_custom_call.1} parent=27 // loop_footer_branch
          %202 = sbr.rel target = $region67
        $region72: #{tpu_custom_call.1} parent=27 // loop_exit
          _
        %v211 = vld [vmem:[#allocation2] sm:$0xff]
        %v212 = vld [vmem:[%s2] sm:$0xff]
        %v213 = vld [vmem:[%s146] sm:$0xff]
        %215 = vset.pattern.permute.xlu0 0
        %216 = vperm.xlu0 %215, %v213
        %v217 = vpop.permute.xlu0 %216
        %v219 = vmul.f32 %v212, %v217
        %v220 = vadd.f32 %v211, %v219
        %vm221 = vcmask 261120
        %222 = vst.msk [vmem:[%s142] sm:$0xff] %vm221, %v220
        %s223 = sand.u32 %s79, 1
        %s224 = scalar_lea.sflag [#allocation7], %s223
        %s225 = sand.u32 %s79, 1
        %s226 = smul.addr %s225, 8
        %s227 = scalar_lea.vmem [#allocation6], %s226
        // Predicated region
        $region73: #{tpu_custom_call.1} parent=27 // pred_check
          %p228 = pneg %p89
        $region74: #{tpu_custom_call.1} parent=27 // pred_check_branch
          %230 = sbr.rel (%p228) target = $region76
        $region75: #{tpu_custom_call.1} parent=27 // pred_region
          %s232 = ssub.s32 128, 128
          %233 = vsyncadd %s224, %s232
          %s234 = smul.addr %s24, 128
          %s235 = scalar_lea.hbm %s4, %s234
          %s237 = sshll.u32 %s227, 4
          %s238 = int_to_ptr.vmem [resolvable:$true] %s237
          %240 = dma.vmem_to_hbm [thread:$0]  %s238, 128, %s235, %s224
        $region76: #{tpu_custom_call.1} parent=27 // pred_fallthru
          _
      $region28: #{tpu_custom_call.1} parent=5 // pred_fallthru
        _
      %p241 = scmp.le.s32.totalorder 2, %s19
      // Predicated region
      $region77: #{tpu_custom_call.1} parent=5 // pred_check
        %p242 = pneg %p241
      $region78: #{tpu_custom_call.1} parent=5 // pred_check_branch
        %244 = sbr.rel (%p242) target = $region80
      $region79: #{tpu_custom_call.1} parent=5 // pred_region
        %s245 = ssub.s32 %s19, 2
        // Predicated region
        $region81: #{tpu_custom_call.1} parent=79 // pred_check
          %p246 = pneg %p95
        $region82: #{tpu_custom_call.1} parent=79 // pred_check_branch
          %248 = sbr.rel (%p246) target = $region84
        $region83: #{tpu_custom_call.1} parent=79 // pred_region
          %s249 = sand.u32 %s80, 1
          %s250 = scalar_lea.sflag [#allocation7], %s249
          %s251 = sand.u32 %s80, 1
          %s252 = smul.addr %s251, 8
          %s253 = scalar_lea.vmem [#allocation6], %s252
          %254 = dma.done %s250, 128
        $region84: #{tpu_custom_call.1} parent=79 // pred_fallthru
          _
      $region80: #{tpu_custom_call.1} parent=5 // pred_fallthru
        _
    $region6: #{tpu_custom_call.1} parent=1 // loop_footer
      %s23 = sadd.s32 1, %s19
    $region7: #{tpu_custom_call.1} parent=1 // loop_footer_branch
      %18 = sbr.rel target = $region3
    $region8: #{tpu_custom_call.1} parent=1 // loop_exit
      _
    %255 = vsyncpa [#allocation7], 1
    %s256 = scalar_lea.sflag [#allocation7], 1
    %257 = vsyncpa %s256, 1
  %258 = vsyncmov [#allocation3]
  %s259 = vpop.sfrf %258
  %p260 = scmp.eq.s32.totalorder %s259, 0
  %p261 = pneg %p260
  %263 = shalt.err (%p261)

</llo_original>
